<compile_context>
chip_gen: v7x
topology: tpu7x:2x2x1
jax: 0.10.0
libtpu: 0.0.40
codegen_flags: <defaults>
</compile_context>

<pallas_src>
import jax
import jax.numpy as jnp
from jax.experimental import pallas as pl
from jax.experimental.pallas import tpu as pltpu


def _round_up(x: int, m: int) -> int:
    return ((x + m - 1) // m) * m


def _cdiv(a: int, b: int) -> int:
    return -(-a // b)


def _sublane(dtype) -> int:
    # sublane packing multiple: 8 for 4-byte, 16 for 2-byte, 32 for 1-byte dtypes
    return max(8, 32 // jnp.dtype(dtype).itemsize)


def _device_policy():
    """(tm, vmem_limit_bytes, min_grid_steps) defaults per TPU generation."""
    kind = ""
    try:
        kind = jax.devices()[0].device_kind.lower()
    except Exception:
        pass
    if "v7" in kind:
        # 64 MiB physical VMEM, 2 TensorCores: tighter budget, split small grids.
        return 256, 48 * 1024 * 1024, 2
    if any(t in kind for t in ("v5e", "v5 lite", "v5litepod", "v6", "trillium")):
        # 128 MiB physical VMEM: big tiles, generous scoped limit.
        return 512, 100 * 1024 * 1024, 1
    # Unknown chip: conservative (compiler-default scoped VMEM limit).
    return 256, None, 1


def _fusion_kernel(w_ref, audio_ref, wmat_ref, bias_ref, text_ref, out_ref):
    # w_ref:    (2,) SMEM, already-softmaxed mixing weights [w_audio, w_text] (f32)
    # audio_ref:(tm, K)  VMEM  -- streamed per row tile
    # wmat_ref: (K, N)   VMEM  -- resident (constant block index)
    # bias_ref: (1, N)   VMEM  -- resident, f32
    # text_ref: (tm, N)  VMEM  -- streamed per row tile
    # out_ref:  (tm, N)  VMEM
    proj = jnp.dot(audio_ref[...], wmat_ref[...],
                   preferred_element_type=jnp.float32)
    proj = proj + bias_ref[...]                                   # (1, N) -> (tm, N)
    fused = w_ref[0] * proj + w_ref[1] * text_ref[...].astype(jnp.float32)
    out_ref[...] = fused.astype(out_ref.dtype)


def weighted_sum_fusion(text_embeds, audio_embeds, weights_param, lin_w, lin_b,
                        *, tm=None, compute_dtype=jnp.bfloat16, out_dtype=None,
                        vmem_limit_bytes=None, min_grid_steps=None):
    """WeightedSumFusion forward.

    text_embeds:  (B, S, llm_dim)
    audio_embeds: (B, S, audio_dim)
    weights_param:(2,) raw mixing logits (softmaxed here)
    lin_w:        (audio_dim, llm_dim)  -- transposed vs. nn.Linear storage
    lin_b:        (llm_dim,)
    compute_dtype: streaming dtype for audio/weight/text (default bf16; the dot
      still accumulates in f32 and the mix is in f32).  None = keep input dtype.
    out_dtype:    result dtype (default: text_embeds.dtype).
    """
    B, S, llm_dim = text_embeds.shape
    audio_dim = audio_embeds.shape[-1]
    M = B * S
    if out_dtype is None:
        out_dtype = text_embeds.dtype

    d_tm, d_vmem, d_min_steps = _device_policy()
    if tm is None:
        tm = d_tm
    if vmem_limit_bytes is None:
        vmem_limit_bytes = d_vmem
    if min_grid_steps is None:
        min_grid_steps = d_min_steps

    # Parameter glue: softmax over the 2 mixing logits (tiny, plain JAX).
    w = jax.nn.softmax(weights_param.astype(jnp.float32), axis=0)  # [w_audio, w_text]

    text2d = text_embeds.reshape(M, llm_dim)
    audio2d = audio_embeds.reshape(M, audio_dim)
    wmat = lin_w
    bias2d = lin_b.reshape(1, llm_dim).astype(jnp.float32)

    if compute_dtype is not None:
        audio2d = audio2d.astype(compute_dtype)
        text2d = text2d.astype(compute_dtype)
        wmat = wmat.astype(compute_dtype)

    a_b = jnp.dtype(audio2d.dtype).itemsize
    t_b = jnp.dtype(text2d.dtype).itemsize
    w_b = jnp.dtype(wmat.dtype).itemsize
    o_b = jnp.dtype(out_dtype).itemsize

    # Row-tile sizing: round to the sublane multiple of the narrowest dtype so
    # small-M / tail tiles stay fully packed (16 for bf16 instead of 8).
    sub = max(_sublane(audio2d.dtype), _sublane(text2d.dtype), _sublane(out_dtype))
    tm_e = min(tm, _round_up(M, sub))
    tm_e = _round_up(tm_e, sub)

    # v7x megacore: make sure the row grid has enough steps to feed both cores.
    if min_grid_steps > 1 and _cdiv(M, tm_e) < min_grid_steps and M >= min_grid_steps * sub:
        tm_e = _round_up(_cdiv(M, min_grid_steps), sub)

    # VMEM budget: resident weight/bias (assume double-buffered by the pipeline)
    # plus double-buffered streamed tiles; shrink tm until it fits with headroom.
    budget = vmem_limit_bytes if vmem_limit_bytes else 32 * 1024 * 1024
    resident = 2 * (audio_dim * llm_dim * w_b + llm_dim * 4)
    # TODO(synk): if `resident` alone exceeds the budget (very large
    # audio_dim*llm_dim), add an N grid axis (row axis innermost) so only a
    # (K, tn) weight slab is resident; not needed for the module's 1280x2048.
    while tm_e > sub:
        streamed = 2 * tm_e * (audio_dim * a_b + llm_dim * (t_b + o_b))
        if resident + streamed <= int(budget * 0.85):
            break
        tm_e = max(sub, _round_up(tm_e // 2, sub))

    grid = (_cdiv(M, tm_e),)

    cost = pl.CostEstimate(
        flops=2 * M * llm_dim * audio_dim,
        transcendentals=0,
        bytes_accessed=int(M * audio_dim * a_b + M * llm_dim * t_b
                           + audio_dim * llm_dim * w_b + llm_dim * 4
                           + M * llm_dim * o_b),
    )

    cp_kwargs = dict(dimension_semantics=("parallel",))
    if vmem_limit_bytes is not None:
        cp_kwargs["vmem_limit_bytes"] = int(vmem_limit_bytes)

    out2d = pl.pallas_call(
        _fusion_kernel,
        out_shape=jax.ShapeDtypeStruct((M, llm_dim), out_dtype),
        grid_spec=pltpu.PrefetchScalarGridSpec(
            num_scalar_prefetch=0,
            grid=grid,
            in_specs=[
                pl.BlockSpec(memory_space=pltpu.SMEM),                  # (2,) mix weights
                pl.BlockSpec((tm_e, audio_dim), lambda i: (i, 0)),      # audio rows
                pl.BlockSpec((audio_dim, llm_dim), lambda i: (0, 0)),   # weight (resident)
                pl.BlockSpec((1, llm_dim), lambda i: (0, 0)),           # bias   (resident)
                pl.BlockSpec((tm_e, llm_dim), lambda i: (i, 0)),        # text rows
            ],
            out_specs=pl.BlockSpec((tm_e, llm_dim), lambda i: (i, 0)),
        ),
        compiler_params=pltpu.CompilerParams(**cp_kwargs),
        cost_estimate=cost,
    )(w, audio2d, wmat, bias2d, text2d)

    return out2d.reshape(B, S, llm_dim)


def _reference(text_embeds, audio_embeds, weights_param, lin_w, lin_b):
    w = jax.nn.softmax(weights_param.astype(jnp.float32), axis=0)
    proj = audio_embeds.astype(jnp.float32) @ lin_w.astype(jnp.float32) + lin_b
    return w[0] * proj + w[1] * text_embeds.astype(jnp.float32)


if __name__ == "__main__":
    # Small shapes consistent with the forward: (B, S, dim) embeddings.
    B, S = 2, 8
    audio_dim, llm_dim = 128, 256

    key = jax.random.PRNGKey(0)
    k1, k2, k3, k4 = jax.random.split(key, 4)

    text_embeds = jax.random.normal(k1, (B, S, llm_dim), dtype=jnp.float32)
    audio_embeds = jax.random.normal(k2, (B, S, audio_dim), dtype=jnp.float32)

    # Deterministic parameter init (weight_init_type='zero_audio').
    lin_w = jax.random.normal(k3, (audio_dim, llm_dim), dtype=jnp.float32) * 0.02
    lin_b = jax.random.normal(k4, (llm_dim,), dtype=jnp.float32) * 0.02
    weights_param = jnp.array([-2.0, 2.0], dtype=jnp.float32)

    ref = _reference(text_embeds, audio_embeds, weights_param, lin_w, lin_b)

    # 1) Default path: bf16 streaming, f32 accumulation, f32 output.
    out = weighted_sum_fusion(text_embeds, audio_embeds, weights_param, lin_w, lin_b)
    out = jax.block_until_ready(out)
    assert out.shape == (B, S, llm_dim) and out.dtype == text_embeds.dtype
    assert jnp.allclose(out, ref, atol=5e-2, rtol=5e-2), "default bf16 path mismatch"

    # 2) Exact f32 path (compute_dtype=None keeps the input dtype).
    out_f32 = weighted_sum_fusion(text_embeds, audio_embeds, weights_param,
                                  lin_w, lin_b, compute_dtype=None)
    out_f32 = jax.block_until_ready(out_f32)
    assert jnp.allclose(out_f32, ref, atol=1e-4, rtol=1e-4), "f32 path mismatch"

    # 3) Ragged M with a multi-step grid and a partial tail tile (no pad/slice).
    Br, Sr = 5, 7                       # M = 35, tm=16 -> grid 3, last tile partial
    t_r = jax.random.normal(k1, (Br, Sr, llm_dim), dtype=jnp.float32)
    a_r = jax.random.normal(k2, (Br, Sr, audio_dim), dtype=jnp.float32)
    ref_r = _reference(t_r, a_r, weights_param, lin_w, lin_b)

    out_r = weighted_sum_fusion(t_r, a_r, weights_param, lin_w, lin_b,
                                tm=16, compute_dtype=None)
    out_r = jax.block_until_ready(out_r)
    assert out_r.shape == (Br, Sr, llm_dim)
    assert jnp.allclose(out_r, ref_r, atol=1e-4, rtol=1e-4), "ragged f32 path mismatch"

    out_r_bf = weighted_sum_fusion(t_r, a_r, weights_param, lin_w, lin_b, tm=16)
    out_r_bf = jax.block_until_ready(out_r_bf)
    assert jnp.allclose(out_r_bf, ref_r, atol=5e-2, rtol=5e-2), "ragged bf16 path mismatch"

    # 4) Fully bf16 production config: bf16 inputs, bf16 output.
    t_bf = text_embeds.astype(jnp.bfloat16)
    a_bf = audio_embeds.astype(jnp.bfloat16)
    out_bf = weighted_sum_fusion(t_bf, a_bf, weights_param, lin_w, lin_b,
                                 out_dtype=jnp.bfloat16)
    out_bf = jax.block_until_ready(out_bf)
    assert out_bf.dtype == jnp.bfloat16
    assert jnp.allclose(out_bf.astype(jnp.float32), ref, atol=5e-2, rtol=5e-2), \
        "bf16 end-to-end path mismatch"

    print("KERNEL_OK")
</pallas_src>

<mosaic_0001>
module attributes {stable_mosaic.version = 11 : i64} {
  func.func @_fusion_kernel(%arg0: i32, %arg1: memref<2xf32, #tpu.memory_space<smem>>, %arg2: memref<16x128xbf16, #tpu.memory_space<vmem>>, %arg3: memref<128x256xbf16, #tpu.memory_space<vmem>>, %arg4: memref<1x256xf32, #tpu.memory_space<vmem>>, %arg5: memref<16x256xbf16, #tpu.memory_space<vmem>>, %arg6: memref<16x256xf32, #tpu.memory_space<vmem>>) attributes {dimension_semantics = [#tpu.dimension_semantics<parallel>], iteration_bounds = array<i64: 1>, scalar_prefetch = 0 : i64, scratch_operands = 0 : i64, tpu.core_type = #tpu.core_type<tc>, window_params = [{transform_indices = @transform_0, window_bounds = array<i64: 2>}, {transform_indices = @transform_1, window_bounds = array<i64: 16, 128>}, {pipeline_mode = #tpu.pipeline_mode<synchronous>, transform_indices = @transform_2, window_bounds = array<i64: 128, 256>}, {pipeline_mode = #tpu.pipeline_mode<synchronous>, transform_indices = @transform_3, window_bounds = array<i64: 1, 256>}, {transform_indices = @transform_4, window_bounds = array<i64: 16, 256>}, {transform_indices = @transform_5, window_bounds = array<i64: 16, 256>}]} {
    %c0 = arith.constant 0 : index
    %c0_0 = arith.constant 0 : index
    %0 = vector.load %arg2[%c0, %c0_0] : memref<16x128xbf16, #tpu.memory_space<vmem>>, vector<16x128xbf16>
    %c0_1 = arith.constant 0 : index
    %c0_2 = arith.constant 0 : index
    %1 = vector.load %arg3[%c0_1, %c0_2] : memref<128x256xbf16, #tpu.memory_space<vmem>>, vector<128x256xbf16>
    %cst = arith.constant dense<0.000000e+00> : vector<16x256xf32>
    %2 = tpu.matmul %0, %1, %cst {dimension_numbers = #tpu.dot_dimension_numbers<[1], [0], [0], [1], [0, 0, 1, 1], [], []>} : vector<16x128xbf16>, vector<128x256xbf16>, vector<16x256xf32> -> vector<16x256xf32>
    %c0_3 = arith.constant 0 : index
    %c0_4 = arith.constant 0 : index
    %3 = vector.load %arg4[%c0_3, %c0_4] : memref<1x256xf32, #tpu.memory_space<vmem>>, vector<1x256xf32>
    %4 = vector.broadcast %3 : vector<1x256xf32> to vector<16x256xf32>
    %5 = arith.addf %2, %4 : vector<16x256xf32>
    %c0_5 = arith.constant 0 : index
    %6 = memref.load %arg1[%c0_5] : memref<2xf32, #tpu.memory_space<smem>>
    %7 = vector.broadcast %6 : f32 to vector<16x256xf32>
    %8 = arith.mulf %7, %5 : vector<16x256xf32>
    %c1 = arith.constant 1 : index
    %9 = memref.load %arg1[%c1] : memref<2xf32, #tpu.memory_space<smem>>
    %c0_6 = arith.constant 0 : index
    %c0_7 = arith.constant 0 : index
    %10 = vector.load %arg5[%c0_6, %c0_7] : memref<16x256xbf16, #tpu.memory_space<vmem>>, vector<16x256xbf16>
    %11 = arith.extf %10 : vector<16x256xbf16> to vector<16x256xf32>
    %12 = vector.broadcast %9 : f32 to vector<16x256xf32>
    %13 = arith.mulf %12, %11 : vector<16x256xf32>
    %14 = arith.addf %8, %13 : vector<16x256xf32>
    %c0_8 = arith.constant 0 : index
    %c0_9 = arith.constant 0 : index
    %15 = vector.load %arg6[%c0_8, %c0_9] : memref<16x256xf32, #tpu.memory_space<vmem>>, vector<16x256xf32>
    tpu.vector_store %arg6[%c0_8, %c0_9], %14 {strides = array<i32>} : memref<16x256xf32, #tpu.memory_space<vmem>>, vector<16x256xf32>,
    return
  }
  func.func @transform_0(%arg0: i32) -> i32 {
    %c0_i32 = arith.constant 0 : i32
    %c0_i32_0 = arith.constant 0 : i32
    return %c0_i32 : i32
  }
  func.func @transform_1(%arg0: i32) -> (i32, i32) {
    %c0_i32 = arith.constant 0 : i32
    %c0_i32_0 = arith.constant 0 : i32
    return %arg0, %c0_i32 : i32, i32
  }
  func.func @transform_2(%arg0: i32) -> (i32, i32) {
    %c0_i32 = arith.constant 0 : i32
    %c0_i32_0 = arith.constant 0 : i32
    %c0_i32_1 = arith.constant 0 : i32
    return %c0_i32, %c0_i32_0 : i32, i32
  }
  func.func @transform_3(%arg0: i32) -> (i32, i32) {
    %c0_i32 = arith.constant 0 : i32
    %c0_i32_0 = arith.constant 0 : i32
    %c0_i32_1 = arith.constant 0 : i32
    return %c0_i32, %c0_i32_0 : i32, i32
  }
  func.func @transform_4(%arg0: i32) -> (i32, i32) {
    %c0_i32 = arith.constant 0 : i32
    %c0_i32_0 = arith.constant 0 : i32
    return %arg0, %c0_i32 : i32, i32
  }
  func.func @transform_5(%arg0: i32) -> (i32, i32) {
    %c0_i32 = arith.constant 0 : i32
    %c0_i32_0 = arith.constant 0 : i32
    return %arg0, %c0_i32 : i32, i32
  }
}

</mosaic_0001>

<llo_original>
// kernel: tpu_custom_call.1
$region0: #{tpu_custom_call.1}
  #allocation0 [shape = 'u32[]', space=smem, size = 0x4, offset = 0x4, fixed_abs, tag = 'smem constant byte address 0x4 - core index']
  #allocation1 [shape = 'u32[144,128]{1,0:T(1,128)}', space=vmem, size = 0x12000, scoped, tag = 'internal scratch']
  %s0 = inlined_call_operand.hbm [shape: f32[2], index: 0, kind: input, shape index: {}]
  %s1 = inlined_call_operand.hbm [shape: bf16[16,128], index: 1, kind: input, shape index: {}]
  %s2 = inlined_call_operand.hbm [shape: bf16[128,256], index: 2, kind: input, shape index: {}]
  %s3 = inlined_call_operand.vmem [shape: f32[1,256], index: 3, kind: input, shape index: {}]
  %s4 = inlined_call_operand.hbm [shape: bf16[16,256], index: 4, kind: input, shape index: {}]
  %s5 = inlined_call_operand.hbm [shape: f32[16,256], index: 5, kind: output, shape index: {}]
  %s6 = sld [smem:[#allocation0]]
  $region46: #{tpu_custom_call.1} parent=0
    _
  %s8 = ssub.s32 1, %s6
  %s9 = scalar_select 0, %s8, %s6
  $region1: #{tpu_custom_call.1} parent=0
    #allocation2 [shape = 'u8[512]{0}', space=smem, size = 0x200, scoped, tag = 'input window, operand 0, single buffered']
    #allocation3 [shape = 's32[1]{0}', space=sflag, size = 0x4, scoped, tag = 'scoped memory for tpu_custom_call.1']
    #allocation4 [shape = 's32[1]{0}', space=sflag, size = 0x4, scoped, tag = 'scoped memory for tpu_custom_call.1']
    #allocation5 [shape = 's32[1]{0}', space=sflag, size = 0x4, scoped, tag = 'scoped memory for tpu_custom_call.1']
    #allocation6 [shape = 'u8[4096]{0}', space=vmem, size = 0x1000, scoped, tag = 'input window, operand 1, single buffered']
    #allocation7 [shape = 'u8[65536]{0}', space=vmem, size = 0x10000, scoped, tag = 'input window, operand 2, single buffered']
    #allocation8 [shape = 's32[1]{0}', space=sflag, size = 0x4, scoped, tag = 'scoped memory for tpu_custom_call.1']
    #allocation9 [shape = 'u8[8192]{0}', space=vmem, size = 0x2000, scoped, tag = 'input window, operand 4, single buffered']
    #allocation10 [shape = 'u8[16384]{0}', space=vmem, size = 0x4000, scoped, tag = 'output window, operand 0, single buffered']
    %10 = vsyncpa [#allocation5], 0
    %11 = vsyncpa [#allocation3], 0
    %12 = vsyncpa [#allocation8], 0
    %13 = vsyncpa [#allocation4], 0
    // Predicated region
    $region2: #{tpu_custom_call.1} parent=1 // pred_check
      _
    $region3: #{tpu_custom_call.1} parent=1 // pred_check_branch
      %15 = sbr.rel (0) target = $region5
    $region4: #{tpu_custom_call.1} parent=1 // pred_region
      %s17 = ssub.s32 16, 16
      %18 = vsyncadd [#allocation5], %s17
      %21 = dma.hbm_to_smem %s0, 16, [#allocation2], [#allocation5]
    $region5: #{tpu_custom_call.1} parent=1 // pred_fallthru
      _
    // Predicated region
    $region6: #{tpu_custom_call.1} parent=1 // pred_check
      _
    $region7: #{tpu_custom_call.1} parent=1 // pred_check_branch
      %23 = sbr.rel (0) target = $region9
    $region8: #{tpu_custom_call.1} parent=1 // pred_region
      %s25 = ssub.s32 128, 128
      %26 = vsyncadd [#allocation3], %s25
      %s27 = sshll.u32 [#allocation6], 4
      %s28 = int_to_ptr.vmem [resolvable:$true] %s27
      %33 = dma.hbm_to_vmem [thread:$0]  %s1, 128, %s28, [#allocation3], 64, 64, 4
    $region9: #{tpu_custom_call.1} parent=1 // pred_fallthru
      _
    // Predicated region
    $region10: #{tpu_custom_call.1} parent=1 // pred_check
      _
    $region11: #{tpu_custom_call.1} parent=1 // pred_check_branch
      %35 = sbr.rel (0) target = $region13
    $region12: #{tpu_custom_call.1} parent=1 // pred_region
      %s37 = ssub.s32 2048, 2048
      %38 = vsyncadd [#allocation8], %s37
      %s39 = sshll.u32 [#allocation7], 4
      %s40 = int_to_ptr.vmem [resolvable:$true] %s39
      %45 = dma.hbm_to_vmem [thread:$0]  %s2, 2048, %s40, [#allocation8], 128, 128, 8
    $region13: #{tpu_custom_call.1} parent=1 // pred_fallthru
      _
    // Predicated region
    $region14: #{tpu_custom_call.1} parent=1 // pred_check
      _
    $region15: #{tpu_custom_call.1} parent=1 // pred_check_branch
      %47 = sbr.rel (0) target = $region17
    $region16: #{tpu_custom_call.1} parent=1 // pred_region
      _
    $region17: #{tpu_custom_call.1} parent=1 // pred_fallthru
      _
    // Predicated region
    $region18: #{tpu_custom_call.1} parent=1 // pred_check
      _
    $region19: #{tpu_custom_call.1} parent=1 // pred_check_branch
      %49 = sbr.rel (0) target = $region21
    $region20: #{tpu_custom_call.1} parent=1 // pred_region
      %s51 = ssub.s32 256, 256
      %52 = vsyncadd [#allocation8], %s51
      %s53 = sshll.u32 [#allocation9], 4
      %s54 = int_to_ptr.vmem [resolvable:$true] %s53
      %59 = dma.hbm_to_vmem [thread:$0]  %s4, 256, %s54, [#allocation8], 128, 128, 8
    $region21: #{tpu_custom_call.1} parent=1 // pred_fallthru
      _
    // Predicated region
    $region22: #{tpu_custom_call.1} parent=1 // pred_check
      _
    $region23: #{tpu_custom_call.1} parent=1 // pred_check_branch
      %61 = sbr.rel (0) target = $region25
    $region24: #{tpu_custom_call.1} parent=1 // pred_region
      %62 = dma.done [#allocation5], 16
    $region25: #{tpu_custom_call.1} parent=1 // pred_fallthru
      _
    // Predicated region
    $region26: #{tpu_custom_call.1} parent=1 // pred_check
      _
    $region27: #{tpu_custom_call.1} parent=1 // pred_check_branch
      %64 = sbr.rel (0) target = $region29
    $region28: #{tpu_custom_call.1} parent=1 // pred_region
      %65 = dma.done [#allocation3], 128
    $region29: #{tpu_custom_call.1} parent=1 // pred_fallthru
      _
    // Predicated region
    $region30: #{tpu_custom_call.1} parent=1 // pred_check
      _
    $region31: #{tpu_custom_call.1} parent=1 // pred_check_branch
      %67 = sbr.rel (0) target = $region33
    $region32: #{tpu_custom_call.1} parent=1 // pred_region
      %68 = dma.done [#allocation8], 2048
    $region33: #{tpu_custom_call.1} parent=1 // pred_fallthru
      _
    // Predicated region
    $region34: #{tpu_custom_call.1} parent=1 // pred_check
      _
    $region35: #{tpu_custom_call.1} parent=1 // pred_check_branch
      %70 = sbr.rel (0) target = $region37
    $region36: #{tpu_custom_call.1} parent=1 // pred_region
      %71 = dma.done [#allocation8], 256
    $region37: #{tpu_custom_call.1} parent=1 // pred_fallthru
      _
    %72 = sfence
    %v74 = vld [vmem:[#allocation6] sm:$0xf]
    %v75 = vld [vmem:[#allocation6 + $0x4] sm:$0xf]
    %v76 = vld [vmem:[#allocation7] sm:$0xff]
    %v77 = vld [vmem:[#allocation7 + $0x8] sm:$0xff]
    %v78 = vld [vmem:[#allocation7 + $0x10] sm:$0xff]
    %v79 = vld [vmem:[#allocation7 + $0x18] sm:$0xff]
    %v80 = vld [vmem:[#allocation7 + $0x20] sm:$0xff]
    %v81 = vld [vmem:[#allocation7 + $0x28] sm:$0xff]
    %v82 = vld [vmem:[#allocation7 + $0x30] sm:$0xff]
    %v83 = vld [vmem:[#allocation7 + $0x38] sm:$0xff]
    %v84 = vld [vmem:[#allocation7 + $0x40] sm:$0xff]
    %v85 = vld [vmem:[#allocation7 + $0x48] sm:$0xff]
    %v86 = vld [vmem:[#allocation7 + $0x50] sm:$0xff]
    %v87 = vld [vmem:[#allocation7 + $0x58] sm:$0xff]
    %v88 = vld [vmem:[#allocation7 + $0x60] sm:$0xff]
    %v89 = vld [vmem:[#allocation7 + $0x68] sm:$0xff]
    %v90 = vld [vmem:[#allocation7 + $0x70] sm:$0xff]
    %v91 = vld [vmem:[#allocation7 + $0x78] sm:$0xff]
    %v92 = vld [vmem:[%s3] sm:$0x3]
    %v94 = vlaneseq
    %v95 = vshrl.u32 %v94, 7
    %v96 = vsub.s32 0, %v95
    %v97 = vrot.slane %v92, %v96
    %v98 = vlaneseq
    %v99 = vshrl.u32 %v98, 7
    %v100 = vsub.s32 1, %v99
    %v101 = vrot.slane %v92, %v100
    %v106 = vunpack.c.l.b16 %v74
    %v107 = vunpack.c.l.b16 %v75
    %v108 = vpack.c.b16 %v107, %v106
    %v126 = vunpack.c.l.b16 %v76
    %v127 = vunpack.c.h.b16 %v76
    %v128 = vunpack.c.l.b16 %v77
    %v129 = vunpack.c.h.b16 %v77
    %v130 = vunpack.c.l.b16 %v78
    %v131 = vunpack.c.h.b16 %v78
    %v132 = vunpack.c.l.b16 %v79
    %v133 = vunpack.c.h.b16 %v79
    %v134 = vunpack.c.l.b16 %v80
    %v135 = vunpack.c.h.b16 %v80
    %v136 = vunpack.c.l.b16 %v81
    %v137 = vunpack.c.h.b16 %v81
    %v138 = vunpack.c.l.b16 %v82
    %v139 = vunpack.c.h.b16 %v82
    %v140 = vunpack.c.l.b16 %v83
    %v141 = vunpack.c.h.b16 %v83
    %v142 = vunpack.c.l.b16 %v84
    %v143 = vunpack.c.h.b16 %v84
    %v144 = vunpack.c.l.b16 %v85
    %v145 = vunpack.c.h.b16 %v85
    %v146 = vunpack.c.l.b16 %v86
    %v147 = vunpack.c.h.b16 %v86
    %v148 = vunpack.c.l.b16 %v87
    %v149 = vunpack.c.h.b16 %v87
    %v150 = vunpack.c.l.b16 %v88
    %v151 = vunpack.c.h.b16 %v88
    %v152 = vunpack.c.l.b16 %v89
    %v153 = vunpack.c.h.b16 %v89
    %v154 = vunpack.c.l.b16 %v90
    %v155 = vunpack.c.h.b16 %v90
    %v156 = vunpack.c.l.b16 %v91
    %v157 = vunpack.c.h.b16 %v91
    %v158 = vpack.c.b16 %v128, %v126
    %v159 = vpack.c.b16 %v129, %v127
    %v160 = vpack.c.b16 %v132, %v130
    %v161 = vpack.c.b16 %v133, %v131
    %v162 = vpack.c.b16 %v136, %v134
    %v163 = vpack.c.b16 %v137, %v135
    %v164 = vpack.c.b16 %v140, %v138
    %v165 = vpack.c.b16 %v141, %v139
    %v166 = vpack.c.b16 %v144, %v142
    %v167 = vpack.c.b16 %v145, %v143
    %v168 = vpack.c.b16 %v148, %v146
    %v169 = vpack.c.b16 %v149, %v147
    %v170 = vpack.c.b16 %v152, %v150
    %v171 = vpack.c.b16 %v153, %v151
    %v172 = vpack.c.b16 %v156, %v154
    %v173 = vpack.c.b16 %v157, %v155
    %190 = vmatprep.subr.bf16.mxu0 %v159
    %191 = vmatpush1.bf16.msra.mxu0 %v158
    %192 = vmatprep.subr.bf16.mxu0 %v161
    %193 = vmatpush1.bf16.msra.mxu0 %v160
    %194 = vmatprep.subr.bf16.mxu0 %v163
    %195 = vmatpush1.bf16.msra.mxu0 %v162
    %196 = vmatprep.subr.bf16.mxu0 %v165
    %197 = vmatpush1.bf16.msra.mxu0 %v164
    %198 = vmatprep.subr.bf16.mxu0 %v167
    %199 = vmatpush1.bf16.msra.mxu0 %v166
    %200 = vmatprep.subr.bf16.mxu0 %v169
    %201 = vmatpush1.bf16.msra.mxu0 %v168
    %202 = vmatprep.subr.bf16.mxu0 %v171
    %203 = vmatpush1.bf16.msra.mxu0 %v170
    %204 = vmatprep.subr.bf16.mxu0 %v173
    %205 = vmatpush1.bf16.msra.mxu0 %v172
    %206 = vmatprep.subr.bf16.mxu0 0
    %207 = vmatpush1.bf16.msra.mxu0 0
    %208 = vmatprep.subr.bf16.mxu0 0
    %209 = vmatpush1.bf16.msra.mxu0 0
    %210 = vmatprep.subr.bf16.mxu0 0
    %211 = vmatpush1.bf16.msra.mxu0 0
    %212 = vmatprep.subr.bf16.mxu0 0
    %213 = vmatpush1.bf16.msra.mxu0 0
    %214 = vmatprep.subr.bf16.mxu0 0
    %215 = vmatpush1.bf16.msra.mxu0 0
    %216 = vmatprep.subr.bf16.mxu0 0
    %217 = vmatpush1.bf16.msra.mxu0 0
    %218 = vmatprep.subr.bf16.mxu0 0
    %219 = vmatpush1.bf16.msra.mxu0 0
    %220 = vmatprep.subr.bf16.mxu0 0
    %221 = vmatpush1.bf16.msra.mxu0 0
    %222 = vmatprep.mubr.bf16.mxu0 0
    %223 = vmatmul.mubr.bf16.gmra.mrb[0].mxu0 %v108
    %v224 = vpop.f32.mrb[0].mxu0
    %v225 = vadd.f32 %v97, %v224
    %v226 = vpop.f32.mrb[0].mxu0
    %v227 = vadd.f32 %v101, %v226
    %v228 = vpop.f32.mrb[0].mxu0
    %v229 = vadd.f32 %v97, %v228
    %v230 = vpop.f32.mrb[0].mxu0
    %v231 = vadd.f32 %v101, %v230
    %232 = vdwg.mxu0
    %s233 = sld [smem:[#allocation2]]
    %v234 = vstv %s233
    %v235 = vmul.f32 %v234, %v225
    %v236 = vmul.f32 %v234, %v227
    %v237 = vmul.f32 %v234, %v229
    %v238 = vmul.f32 %v234, %v231
    %s239 = sld [smem:[#allocation2 + $0x1]]
    %v240 = vld [vmem:[#allocation9] sm:$0xff]
    %v241 = vld [vmem:[#allocation9 + $0x8] sm:$0xff]
    %v242 = vunpack.c.l.bf16 %v240
    %v243 = vunpack.c.h.bf16 %v240
    %v244 = vunpack.c.l.bf16 %v241
    %v245 = vunpack.c.h.bf16 %v241
    %v246 = vstv %s239
    %v247 = vmul.f32 %v246, %v242
    %v248 = vmul.f32 %v246, %v243
    %v249 = vmul.f32 %v246, %v244
    %v250 = vmul.f32 %v246, %v245
    %v251 = vadd.f32 %v235, %v247
    %v252 = vadd.f32 %v236, %v248
    %v253 = vadd.f32 %v237, %v249
    %v254 = vadd.f32 %v238, %v250
    %255 = vst [vmem:[#allocation10] sm:$0xff] %v251
    %256 = vst [vmem:[#allocation10 + $0x8] sm:$0xff] %v252
    %257 = vst [vmem:[#allocation10 + $0x10] sm:$0xff] %v253
    %258 = vst [vmem:[#allocation10 + $0x18] sm:$0xff] %v254
    // Predicated region
    $region38: #{tpu_custom_call.1} parent=1 // pred_check
      _
    $region39: #{tpu_custom_call.1} parent=1 // pred_check_branch
      %260 = sbr.rel (0) target = $region41
    $region40: #{tpu_custom_call.1} parent=1 // pred_region
      %s262 = ssub.s32 512, 512
      %263 = vsyncadd [#allocation4], %s262
      %s264 = sshll.u32 [#allocation10], 4
      %s265 = int_to_ptr.vmem [resolvable:$true] %s264
      %270 = dma.vmem_to_hbm [thread:$0]  %s265, 512, %s5, [#allocation4], 256, 256, 16
    $region41: #{tpu_custom_call.1} parent=1 // pred_fallthru
      _
    // Predicated region
    $region42: #{tpu_custom_call.1} parent=1 // pred_check
      _
    $region43: #{tpu_custom_call.1} parent=1 // pred_check_branch
      %272 = sbr.rel (0) target = $region45
    $region44: #{tpu_custom_call.1} parent=1 // pred_region
      %273 = dma.done [#allocation4], 512
    $region45: #{tpu_custom_call.1} parent=1 // pred_fallthru
      _
    %274 = vsyncpa [#allocation3], 1
    %275 = vsyncpa [#allocation8], 1
    %276 = vsyncpa [#allocation4], 1
    %277 = vsyncpa [#allocation5], 1

</llo_original>
